<compile_context>
chip_gen: v5e
topology: v5e:2x2
jax: 0.10.0
libtpu: 0.0.40
codegen_flags: <defaults>
</compile_context>

<pallas_src>
import functools

import jax
import jax.numpy as jnp
from jax.experimental import pallas as pl
from jax.experimental.pallas import tpu as pltpu


def _round_up(x, m):
    return (x + m - 1) // m * m


# ----------------------------------------------------------------------------
# Fused kernel over one tile of token rows.
#   ch_ref : (TN, C*Dc)      gathered char embeddings, flattened per token
#   wd_ref : (TN, Dw)        gathered word embeddings
#   tap    : (K*Dc, Dp)      shared conv2d tap block (output padded to Dp)
#   b2     : (1, Dp)         conv2d bias, zero-padded (f32)
#   wc     : (Dp, Dp)        conv1d weight, char half
#   ww     : (Dw, Dp)        conv1d weight, word half
#   wg/bg  : (2, Dp, Dp) / (2, 1, Dp)   highway gate weights / biases
#   wl/bl  : (2, Dp, Dp) / (2, 1, Dp)   highway linear weights / biases
#   out    : (TN, Dp)        lane-dense output (padded channels are 0)
# ----------------------------------------------------------------------------
def embedding_kernel(ch_ref, wd_ref, tap_ref, b2_ref, wc_ref, ww_ref,
                     wg_ref, bg_ref, wl_ref, bl_ref, out_ref,
                     *, n_windows, char_dim, kernel_w):
    ch = ch_ref[...]                          # (TN, C*Dc), matmul dtype
    tap = tap_ref[...]                        # (K*Dc, Dp)
    span = kernel_w * char_dim

    # --- char branch: per-window matmul vs. shared tap block, running max ----
    # (relu/max commute and the bias is window-invariant, so bias + relu are
    #  applied once after the max.)
    acc = jnp.dot(ch[:, :span], tap, preferred_element_type=jnp.float32)
    for w in range(1, n_windows):             # static, small W
        off = w * char_dim
        acc = jnp.maximum(
            acc, jnp.dot(ch[:, off:off + span], tap,
                         preferred_element_type=jnp.float32))
    ch_feat = jnp.maximum(acc + b2_ref[...], 0.0)        # (TN, Dp) f32

    # --- concat + pointwise conv1d (no bias):  [ch | wd] @ W1^T --------------
    x = (jnp.dot(ch_feat.astype(wc_ref.dtype), wc_ref[...],
                 preferred_element_type=jnp.float32)
         + jnp.dot(wd_ref[...], ww_ref[...],
                   preferred_element_type=jnp.float32))  # (TN, Dp) f32

    # --- 2-layer Highway (elementwise math kept in f32) ----------------------
    for i in range(2):                                   # static
        g = jax.nn.sigmoid(
            jnp.dot(x.astype(wg_ref.dtype), wg_ref[i],
                    preferred_element_type=jnp.float32) + bg_ref[i])
        nl = (jnp.dot(x.astype(wl_ref.dtype), wl_ref[i],
                      preferred_element_type=jnp.float32) + bl_ref[i])
        x = g * nl + (1.0 - g) * x

    out_ref[...] = x.astype(out_ref.dtype)


# ----------------------------------------------------------------------------
# Pallas wrapper (rows already padded to a multiple of tile_n).
# ----------------------------------------------------------------------------
def fused_embedding_rows(ch_rows, wd_rows, tap, b2, wc, ww, wg, bg, wl, bl,
                         *, n_windows, char_dim, kernel_w, tile_n):
    N, F = ch_rows.shape
    Dw = wd_rows.shape[1]
    Dp = wc.shape[1]
    assert N % tile_n == 0, (N, tile_n)
    grid_n = N // tile_n

    kernel = functools.partial(embedding_kernel, n_windows=n_windows,
                               char_dim=char_dim, kernel_w=kernel_w)

    def const2(shape):
        return pl.BlockSpec(shape, lambda i: (0, 0))

    def const3(shape):
        return pl.BlockSpec(shape, lambda i: (0, 0, 0))

    return pl.pallas_call(
        kernel,
        out_shape=jax.ShapeDtypeStruct((N, Dp), jnp.float32),
        grid_spec=pltpu.PrefetchScalarGridSpec(
            num_scalar_prefetch=0,
            grid=(grid_n,),
            in_specs=[
                pl.BlockSpec((tile_n, F), lambda i: (i, 0)),
                pl.BlockSpec((tile_n, Dw), lambda i: (i, 0)),
                const2(tap.shape), const2(b2.shape),
                const2(wc.shape), const2(ww.shape),
                const3(wg.shape), const3(bg.shape),
                const3(wl.shape), const3(bl.shape),
            ],
            out_specs=pl.BlockSpec((tile_n, Dp), lambda i: (i, 0)),
        ),
        # Single row-tile axis, sharded across TensorCores on v7x.
        compiler_params=pltpu.CompilerParams(
            dimension_semantics=("parallel",)),
    )(ch_rows, wd_rows, tap, b2, wc, ww, wg, bg, wl, bl)


# ----------------------------------------------------------------------------
# One-time weight packing (hoisted out of the per-call path).
# Casting the tables to bf16 here intentionally quantizes the embeddings
# themselves — the gathered bytes are the dominant HBM stream.
# ----------------------------------------------------------------------------
def pack_embedding_params(params, *, matmul_dtype=jnp.bfloat16):
    word_mat, char_mat = params["word_mat"], params["char_mat"]
    Dm, Dc, _, K = params["conv2d_w"].shape
    Dw = word_mat.shape[1]
    Dp = _round_up(Dm, 128)                # lane-dense feature axis
    pad_o = Dp - Dm
    mm_dt = matmul_dtype

    # conv2d taps (Dm, Dc, 1, K) -> shared tap block (K*Dc, Dp)
    taps = jnp.transpose(params["conv2d_w"][:, :, 0, :], (2, 1, 0))   # (K,Dc,Dm)
    tap = jnp.pad(taps.reshape(K * Dc, Dm),
                  ((0, 0), (0, pad_o))).astype(mm_dt)                 # (K*Dc,Dp)
    b2 = jnp.pad(params["conv2d_b"], (0, pad_o)).reshape(1, Dp).astype(jnp.float32)

    # conv1d weight (Dm, Dm+Dw, 1): split halves, transpose, zero-pad to Dp
    w1 = params["conv1d_w"][:, :, 0]                                  # (Dm, Dm+Dw)
    wc = jnp.pad(w1[:, :Dm].T, ((0, pad_o), (0, pad_o))).astype(mm_dt)  # (Dp,Dp)
    ww = jnp.pad(w1[:, Dm:].T, ((0, 0), (0, pad_o))).astype(mm_dt)      # (Dw,Dp)

    # highway weights: transpose, zero-pad both feature axes to Dp
    wg = jnp.pad(jnp.transpose(params["hw_gate_w"], (0, 2, 1)),
                 ((0, 0), (0, pad_o), (0, pad_o))).astype(mm_dt)      # (2,Dp,Dp)
    wl = jnp.pad(jnp.transpose(params["hw_lin_w"], (0, 2, 1)),
                 ((0, 0), (0, pad_o), (0, pad_o))).astype(mm_dt)
    bg = jnp.pad(params["hw_gate_b"],
                 ((0, 0), (0, pad_o))).reshape(2, 1, Dp).astype(jnp.float32)
    bl = jnp.pad(params["hw_lin_b"],
                 ((0, 0), (0, pad_o))).reshape(2, 1, Dp).astype(jnp.float32)

    packed = {
        "word_mat": word_mat.astype(mm_dt),
        "char_mat": char_mat.astype(mm_dt),
        "tap": tap, "b2": b2, "wc": wc, "ww": ww,
        "wg": wg, "bg": bg, "wl": wl, "bl": bl,
    }
    meta = {"d_model": Dm}
    return packed, meta


# ----------------------------------------------------------------------------
# Full forward. Returns (B, d_model, L) like the PyTorch module.
# ----------------------------------------------------------------------------
def embedding_forward(w_ids, c_ids, packed, *, d_model, tile_n=512):
    B, L = w_ids.shape
    C = c_ids.shape[2]
    word_mat, char_mat = packed["word_mat"], packed["char_mat"]
    Dc = char_mat.shape[1]
    K = packed["tap"].shape[0] // Dc
    W = C - K + 1
    mm_dt = packed["tap"].dtype

    # --- glue: embedding gathers (tables already in matmul dtype) ------------
    # TODO(synk): fuse these gathers into the Pallas input pipeline
    #             (allow_input_fusion / in-kernel DMA gather) to cut the
    #             remaining HBM round-trip.
    N = B * L
    wd_rows = jnp.take(word_mat, w_ids.reshape(-1), axis=0)          # (N, Dw)
    ch_rows = jnp.take(char_mat, c_ids.reshape(-1), axis=0)          # (N*C, Dc)
    ch_rows = ch_rows.reshape(N, C * Dc)                             # lane-dense

    # --- row tiling: large tiles, >=2 tiles when possible (v7x 2 TCs),
    #     16-sublane rounding for bf16 operands, zero-pad the tail ------------
    sub = 16 if mm_dt == jnp.bfloat16 else 8
    tn = max(sub, min(int(tile_n), _round_up(pl.cdiv(N, 2), sub)))
    tn = _round_up(tn, sub)
    grid_n = pl.cdiv(N, tn)
    N_pad = grid_n * tn
    if N_pad != N:
        ch_rows = jnp.pad(ch_rows, ((0, N_pad - N), (0, 0)))
        wd_rows = jnp.pad(wd_rows, ((0, N_pad - N), (0, 0)))

    out_rows = fused_embedding_rows(
        ch_rows, wd_rows, packed["tap"], packed["b2"], packed["wc"],
        packed["ww"], packed["wg"], packed["bg"], packed["wl"], packed["bl"],
        n_windows=W, char_dim=Dc, kernel_w=K, tile_n=tn)

    out_rows = out_rows[:N, :d_model]                # drop row / channel pad
    return jnp.transpose(out_rows.reshape(B, L, d_model), (0, 2, 1))  # (B,Dm,L)


# ----------------------------------------------------------------------------
# Pure-JAX reference (mirrors the PyTorch graph) for correctness check.
# ----------------------------------------------------------------------------
def embedding_ref(w_ids, c_ids, params):
    word_mat, char_mat = params["word_mat"], params["char_mat"]
    wd = jnp.take(word_mat, w_ids, axis=0)               # (B, L, Dw)
    ch = jnp.take(char_mat, c_ids, axis=0)               # (B, L, C, Dc)
    ch = jnp.transpose(ch, (0, 3, 1, 2))                 # (B, Dc, L, C)  NCHW
    out = jax.lax.conv_general_dilated(
        ch, params["conv2d_w"], (1, 1), "VALID",
        dimension_numbers=("NCHW", "OIHW", "NCHW"))
    out = out + params["conv2d_b"][None, :, None, None]
    out = jax.nn.relu(out)
    ch_feat = out.max(axis=3)                            # (B, Dm, L)
    emb = jnp.concatenate([ch_feat, jnp.transpose(wd, (0, 2, 1))], axis=1)
    x = jnp.einsum("od,bdl->bol", params["conv1d_w"][:, :, 0], emb)
    for i in range(2):
        g = jax.nn.sigmoid(
            jnp.einsum("od,bdl->bol", params["hw_gate_w"][i], x)
            + params["hw_gate_b"][i][None, :, None])
        nl = (jnp.einsum("od,bdl->bol", params["hw_lin_w"][i], x)
              + params["hw_lin_b"][i][None, :, None])
        x = g * nl + (1.0 - g) * x
    return x                                             # (B, Dm, L)


if __name__ == "__main__":
    # Small, module-consistent shapes.
    B, L, C = 2, 8, 16          # batch, seq len, chars per word
    Dw, Dc, Dm = 32, 16, 32     # word-emb dim, char-emb dim, d_model
    vocab_w, vocab_c = 100, 60

    key = jax.random.PRNGKey(0)
    ks = jax.random.split(key, 12)

    params = {
        "word_mat": jax.random.normal(ks[0], (vocab_w, Dw), jnp.float32) * 0.1,
        "char_mat": jax.random.normal(ks[1], (vocab_c, Dc), jnp.float32) * 0.1,
        "conv2d_w": jax.random.normal(ks[2], (Dm, Dc, 1, 5), jnp.float32)
                    * (2.0 / (Dc * 5)) ** 0.5,
        "conv2d_b": jax.random.normal(ks[3], (Dm,), jnp.float32) * 0.01,
        "conv1d_w": jax.random.normal(ks[4], (Dm, Dm + Dw, 1), jnp.float32)
                    * (1.0 / (Dm + Dw)) ** 0.5,
        "hw_gate_w": jax.random.normal(ks[5], (2, Dm, Dm), jnp.float32)
                     * (1.0 / Dm) ** 0.5,
        "hw_gate_b": jax.random.normal(ks[6], (2, Dm), jnp.float32) * 0.01,
        "hw_lin_w": jax.random.normal(ks[7], (2, Dm, Dm), jnp.float32)
                    * (1.0 / Dm) ** 0.5,
        "hw_lin_b": jax.random.normal(ks[8], (2, Dm), jnp.float32) * 0.01,
    }

    w_ids = jax.random.randint(ks[9], (B, L), 0, vocab_w, dtype=jnp.int32)
    c_ids = jax.random.randint(ks[10], (B, L, C), 0, vocab_c, dtype=jnp.int32)

    ref = embedding_ref(w_ids, c_ids, params)

    # f32 matmul path (numerically faithful to the PyTorch module).
    packed_f32, meta = pack_embedding_params(params, matmul_dtype=jnp.float32)
    fwd_f32 = jax.jit(functools.partial(embedding_forward, tile_n=512, **meta))
    out = jax.block_until_ready(fwd_f32(w_ids, c_ids, packed_f32))
    assert out.shape == (B, Dm, L), out.shape
    assert jnp.allclose(out, ref, rtol=1e-4, atol=1e-4), (
        float(jnp.max(jnp.abs(out - ref))))

    # Default bf16 matmul-operand path (all generations; f32 accumulation and
    # elementwise math), looser tolerance (tables quantized to bf16).
    packed_bf16, meta = pack_embedding_params(params)
    fwd_bf16 = jax.jit(functools.partial(embedding_forward, tile_n=512, **meta))
    out_bf16 = jax.block_until_ready(fwd_bf16(w_ids, c_ids, packed_bf16))
    assert out_bf16.shape == (B, Dm, L), out_bf16.shape
    assert jnp.allclose(out_bf16, ref, rtol=5e-2, atol=5e-2), (
        float(jnp.max(jnp.abs(out_bf16 - ref))))

    print("KERNEL_OK")
</pallas_src>

<mosaic_0001>
module attributes {stable_mosaic.version = 11 : i64} {
  func.func @embedding_kernel(%arg0: i32, %arg1: memref<8x256xf32, #tpu.memory_space<vmem>>, %arg2: memref<8x32xf32, #tpu.memory_space<vmem>>, %arg3: memref<80x128xf32, #tpu.memory_space<vmem>>, %arg4: memref<1x128xf32, #tpu.memory_space<vmem>>, %arg5: memref<128x128xf32, #tpu.memory_space<vmem>>, %arg6: memref<32x128xf32, #tpu.memory_space<vmem>>, %arg7: memref<2x128x128xf32, #tpu.memory_space<vmem>>, %arg8: memref<2x1x128xf32, #tpu.memory_space<vmem>>, %arg9: memref<2x128x128xf32, #tpu.memory_space<vmem>>, %arg10: memref<2x1x128xf32, #tpu.memory_space<vmem>>, %arg11: memref<8x128xf32, #tpu.memory_space<vmem>>) attributes {dimension_semantics = [#tpu.dimension_semantics<parallel>], iteration_bounds = array<i64: 2>, scalar_prefetch = 0 : i64, scratch_operands = 0 : i64, tpu.core_type = #tpu.core_type<tc>, window_params = [{transform_indices = @transform_0, window_bounds = array<i64: 8, 256>}, {transform_indices = @transform_1, window_bounds = array<i64: 8, 32>}, {pipeline_mode = #tpu.pipeline_mode<synchronous>, transform_indices = @transform_2, window_bounds = array<i64: 80, 128>}, {pipeline_mode = #tpu.pipeline_mode<synchronous>, transform_indices = @transform_3, window_bounds = array<i64: 1, 128>}, {pipeline_mode = #tpu.pipeline_mode<synchronous>, transform_indices = @transform_4, window_bounds = array<i64: 128, 128>}, {pipeline_mode = #tpu.pipeline_mode<synchronous>, transform_indices = @transform_5, window_bounds = array<i64: 32, 128>}, {pipeline_mode = #tpu.pipeline_mode<synchronous>, transform_indices = @transform_6, window_bounds = array<i64: 2, 128, 128>}, {pipeline_mode = #tpu.pipeline_mode<synchronous>, transform_indices = @transform_7, window_bounds = array<i64: 2, 1, 128>}, {pipeline_mode = #tpu.pipeline_mode<synchronous>, transform_indices = @transform_8, window_bounds = array<i64: 2, 128, 128>}, {pipeline_mode = #tpu.pipeline_mode<synchronous>, transform_indices = @transform_9, window_bounds = array<i64: 2, 1, 128>}, {transform_indices = @transform_10, window_bounds = array<i64: 8, 128>}]} {
    %c0 = arith.constant 0 : index
    %c0_0 = arith.constant 0 : index
    %0 = vector.load %arg1[%c0, %c0_0] : memref<8x256xf32, #tpu.memory_space<vmem>>, vector<8x256xf32>
    %c0_1 = arith.constant 0 : index
    %c0_2 = arith.constant 0 : index
    %1 = vector.load %arg3[%c0_1, %c0_2] : memref<80x128xf32, #tpu.memory_space<vmem>>, vector<80x128xf32>
    %2 = vector.extract_strided_slice %0 {offsets = [0, 0], sizes = [8, 80], strides = [1, 1]} : vector<8x256xf32> to vector<8x80xf32>
    %cst = arith.constant dense<0.000000e+00> : vector<8x128xf32>
    %3 = tpu.matmul %2, %1, %cst {dimension_numbers = #tpu.dot_dimension_numbers<[1], [0], [0], [1], [0, 0, 1, 1], [], []>} : vector<8x80xf32>, vector<80x128xf32>, vector<8x128xf32> -> vector<8x128xf32>
    %4 = vector.extract_strided_slice %0 {offsets = [0, 16], sizes = [8, 80], strides = [1, 1]} : vector<8x256xf32> to vector<8x80xf32>
    %cst_3 = arith.constant dense<0.000000e+00> : vector<8x128xf32>
    %5 = tpu.matmul %4, %1, %cst_3 {dimension_numbers = #tpu.dot_dimension_numbers<[1], [0], [0], [1], [0, 0, 1, 1], [], []>} : vector<8x80xf32>, vector<80x128xf32>, vector<8x128xf32> -> vector<8x128xf32>
    %6 = arith.maximumf %3, %5 : vector<8x128xf32>
    %7 = vector.extract_strided_slice %0 {offsets = [0, 32], sizes = [8, 80], strides = [1, 1]} : vector<8x256xf32> to vector<8x80xf32>
    %cst_4 = arith.constant dense<0.000000e+00> : vector<8x128xf32>
    %8 = tpu.matmul %7, %1, %cst_4 {dimension_numbers = #tpu.dot_dimension_numbers<[1], [0], [0], [1], [0, 0, 1, 1], [], []>} : vector<8x80xf32>, vector<80x128xf32>, vector<8x128xf32> -> vector<8x128xf32>
    %9 = arith.maximumf %6, %8 : vector<8x128xf32>
    %10 = vector.extract_strided_slice %0 {offsets = [0, 48], sizes = [8, 80], strides = [1, 1]} : vector<8x256xf32> to vector<8x80xf32>
    %cst_5 = arith.constant dense<0.000000e+00> : vector<8x128xf32>
    %11 = tpu.matmul %10, %1, %cst_5 {dimension_numbers = #tpu.dot_dimension_numbers<[1], [0], [0], [1], [0, 0, 1, 1], [], []>} : vector<8x80xf32>, vector<80x128xf32>, vector<8x128xf32> -> vector<8x128xf32>
    %12 = arith.maximumf %9, %11 : vector<8x128xf32>
    %13 = vector.extract_strided_slice %0 {offsets = [0, 64], sizes = [8, 80], strides = [1, 1]} : vector<8x256xf32> to vector<8x80xf32>
    %cst_6 = arith.constant dense<0.000000e+00> : vector<8x128xf32>
    %14 = tpu.matmul %13, %1, %cst_6 {dimension_numbers = #tpu.dot_dimension_numbers<[1], [0], [0], [1], [0, 0, 1, 1], [], []>} : vector<8x80xf32>, vector<80x128xf32>, vector<8x128xf32> -> vector<8x128xf32>
    %15 = arith.maximumf %12, %14 : vector<8x128xf32>
    %16 = vector.extract_strided_slice %0 {offsets = [0, 80], sizes = [8, 80], strides = [1, 1]} : vector<8x256xf32> to vector<8x80xf32>
    %cst_7 = arith.constant dense<0.000000e+00> : vector<8x128xf32>
    %17 = tpu.matmul %16, %1, %cst_7 {dimension_numbers = #tpu.dot_dimension_numbers<[1], [0], [0], [1], [0, 0, 1, 1], [], []>} : vector<8x80xf32>, vector<80x128xf32>, vector<8x128xf32> -> vector<8x128xf32>
    %18 = arith.maximumf %15, %17 : vector<8x128xf32>
    %19 = vector.extract_strided_slice %0 {offsets = [0, 96], sizes = [8, 80], strides = [1, 1]} : vector<8x256xf32> to vector<8x80xf32>
    %cst_8 = arith.constant dense<0.000000e+00> : vector<8x128xf32>
    %20 = tpu.matmul %19, %1, %cst_8 {dimension_numbers = #tpu.dot_dimension_numbers<[1], [0], [0], [1], [0, 0, 1, 1], [], []>} : vector<8x80xf32>, vector<80x128xf32>, vector<8x128xf32> -> vector<8x128xf32>
    %21 = arith.maximumf %18, %20 : vector<8x128xf32>
    %22 = vector.extract_strided_slice %0 {offsets = [0, 112], sizes = [8, 80], strides = [1, 1]} : vector<8x256xf32> to vector<8x80xf32>
    %cst_9 = arith.constant dense<0.000000e+00> : vector<8x128xf32>
    %23 = tpu.matmul %22, %1, %cst_9 {dimension_numbers = #tpu.dot_dimension_numbers<[1], [0], [0], [1], [0, 0, 1, 1], [], []>} : vector<8x80xf32>, vector<80x128xf32>, vector<8x128xf32> -> vector<8x128xf32>
    %24 = arith.maximumf %21, %23 : vector<8x128xf32>
    %25 = vector.extract_strided_slice %0 {offsets = [0, 128], sizes = [8, 80], strides = [1, 1]} : vector<8x256xf32> to vector<8x80xf32>
    %cst_10 = arith.constant dense<0.000000e+00> : vector<8x128xf32>
    %26 = tpu.matmul %25, %1, %cst_10 {dimension_numbers = #tpu.dot_dimension_numbers<[1], [0], [0], [1], [0, 0, 1, 1], [], []>} : vector<8x80xf32>, vector<80x128xf32>, vector<8x128xf32> -> vector<8x128xf32>
    %27 = arith.maximumf %24, %26 : vector<8x128xf32>
    %28 = vector.extract_strided_slice %0 {offsets = [0, 144], sizes = [8, 80], strides = [1, 1]} : vector<8x256xf32> to vector<8x80xf32>
    %cst_11 = arith.constant dense<0.000000e+00> : vector<8x128xf32>
    %29 = tpu.matmul %28, %1, %cst_11 {dimension_numbers = #tpu.dot_dimension_numbers<[1], [0], [0], [1], [0, 0, 1, 1], [], []>} : vector<8x80xf32>, vector<80x128xf32>, vector<8x128xf32> -> vector<8x128xf32>
    %30 = arith.maximumf %27, %29 : vector<8x128xf32>
    %31 = vector.extract_strided_slice %0 {offsets = [0, 160], sizes = [8, 80], strides = [1, 1]} : vector<8x256xf32> to vector<8x80xf32>
    %cst_12 = arith.constant dense<0.000000e+00> : vector<8x128xf32>
    %32 = tpu.matmul %31, %1, %cst_12 {dimension_numbers = #tpu.dot_dimension_numbers<[1], [0], [0], [1], [0, 0, 1, 1], [], []>} : vector<8x80xf32>, vector<80x128xf32>, vector<8x128xf32> -> vector<8x128xf32>
    %33 = arith.maximumf %30, %32 : vector<8x128xf32>
    %34 = vector.extract_strided_slice %0 {offsets = [0, 176], sizes = [8, 80], strides = [1, 1]} : vector<8x256xf32> to vector<8x80xf32>
    %cst_13 = arith.constant dense<0.000000e+00> : vector<8x128xf32>
    %35 = tpu.matmul %34, %1, %cst_13 {dimension_numbers = #tpu.dot_dimension_numbers<[1], [0], [0], [1], [0, 0, 1, 1], [], []>} : vector<8x80xf32>, vector<80x128xf32>, vector<8x128xf32> -> vector<8x128xf32>
    %36 = arith.maximumf %33, %35 : vector<8x128xf32>
    %c0_14 = arith.constant 0 : index
    %c0_15 = arith.constant 0 : index
    %37 = vector.load %arg4[%c0_14, %c0_15] : memref<1x128xf32, #tpu.memory_space<vmem>>, vector<1x128xf32>
    %38 = vector.broadcast %37 : vector<1x128xf32> to vector<8x128xf32>
    %39 = arith.addf %36, %38 : vector<8x128xf32>
    %cst_16 = arith.constant 0.000000e+00 : f32
    %40 = vector.broadcast %cst_16 : f32 to vector<8x128xf32>
    %41 = arith.maximumf %39, %40 : vector<8x128xf32>
    %c0_17 = arith.constant 0 : index
    %c0_18 = arith.constant 0 : index
    %42 = vector.load %arg5[%c0_17, %c0_18] : memref<128x128xf32, #tpu.memory_space<vmem>>, vector<128x128xf32>
    %cst_19 = arith.constant dense<0.000000e+00> : vector<8x128xf32>
    %43 = tpu.matmul %41, %42, %cst_19 {dimension_numbers = #tpu.dot_dimension_numbers<[1], [0], [0], [1], [0, 0, 1, 1], [], []>} : vector<8x128xf32>, vector<128x128xf32>, vector<8x128xf32> -> vector<8x128xf32>
    %c0_20 = arith.constant 0 : index
    %c0_21 = arith.constant 0 : index
    %44 = vector.load %arg2[%c0_20, %c0_21] : memref<8x32xf32, #tpu.memory_space<vmem>>, vector<8x32xf32>
    %c0_22 = arith.constant 0 : index
    %c0_23 = arith.constant 0 : index
    %45 = vector.load %arg6[%c0_22, %c0_23] : memref<32x128xf32, #tpu.memory_space<vmem>>, vector<32x128xf32>
    %cst_24 = arith.constant dense<0.000000e+00> : vector<8x128xf32>
    %46 = tpu.matmul %44, %45, %cst_24 {dimension_numbers = #tpu.dot_dimension_numbers<[1], [0], [0], [1], [0, 0, 1, 1], [], []>} : vector<8x32xf32>, vector<32x128xf32>, vector<8x128xf32> -> vector<8x128xf32>
    %47 = arith.addf %43, %46 : vector<8x128xf32>
    %c0_25 = arith.constant 0 : index
    %c0_26 = arith.constant 0 : index
    %c0_27 = arith.constant 0 : index
    %48 = vector.load %arg7[%c0_25, %c0_26, %c0_27] : memref<2x128x128xf32, #tpu.memory_space<vmem>>, vector<1x128x128xf32>
    %49 = vector.shape_cast %48 : vector<1x128x128xf32> to vector<128x128xf32>
    %cst_28 = arith.constant dense<0.000000e+00> : vector<8x128xf32>
    %50 = tpu.matmul %47, %49, %cst_28 {dimension_numbers = #tpu.dot_dimension_numbers<[1], [0], [0], [1], [0, 0, 1, 1], [], []>} : vector<8x128xf32>, vector<128x128xf32>, vector<8x128xf32> -> vector<8x128xf32>
    %c0_29 = arith.constant 0 : index
    %c0_30 = arith.constant 0 : index
    %c0_31 = arith.constant 0 : index
    %51 = vector.load %arg8[%c0_29, %c0_30, %c0_31] : memref<2x1x128xf32, #tpu.memory_space<vmem>>, vector<1x1x128xf32>
    %52 = vector.shape_cast %51 : vector<1x1x128xf32> to vector<1x128xf32>
    %53 = vector.broadcast %52 : vector<1x128xf32> to vector<8x128xf32>
    %54 = arith.addf %50, %53 : vector<8x128xf32>
    %55 = arith.negf %54 : vector<8x128xf32>
    %56 = math.exp %55 : vector<8x128xf32>
    %cst_32 = arith.constant 1.000000e+00 : f32
    %57 = vector.broadcast %cst_32 : f32 to vector<8x128xf32>
    %58 = arith.addf %57, %56 : vector<8x128xf32>
    %59 = arith.divf %57, %58 : vector<8x128xf32>
    %c0_33 = arith.constant 0 : index
    %c0_34 = arith.constant 0 : index
    %c0_35 = arith.constant 0 : index
    %60 = vector.load %arg9[%c0_33, %c0_34, %c0_35] : memref<2x128x128xf32, #tpu.memory_space<vmem>>, vector<1x128x128xf32>
    %61 = vector.shape_cast %60 : vector<1x128x128xf32> to vector<128x128xf32>
    %cst_36 = arith.constant dense<0.000000e+00> : vector<8x128xf32>
    %62 = tpu.matmul %47, %61, %cst_36 {dimension_numbers = #tpu.dot_dimension_numbers<[1], [0], [0], [1], [0, 0, 1, 1], [], []>} : vector<8x128xf32>, vector<128x128xf32>, vector<8x128xf32> -> vector<8x128xf32>
    %c0_37 = arith.constant 0 : index
    %c0_38 = arith.constant 0 : index
    %c0_39 = arith.constant 0 : index
    %63 = vector.load %arg10[%c0_37, %c0_38, %c0_39] : memref<2x1x128xf32, #tpu.memory_space<vmem>>, vector<1x1x128xf32>
    %64 = vector.shape_cast %63 : vector<1x1x128xf32> to vector<1x128xf32>
    %65 = vector.broadcast %64 : vector<1x128xf32> to vector<8x128xf32>
    %66 = arith.addf %62, %65 : vector<8x128xf32>
    %67 = arith.mulf %59, %66 : vector<8x128xf32>
    %cst_40 = arith.constant 1.000000e+00 : f32
    %68 = vector.broadcast %cst_40 : f32 to vector<8x128xf32>
    %69 = arith.subf %68, %59 : vector<8x128xf32>
    %70 = arith.mulf %69, %47 : vector<8x128xf32>
    %71 = arith.addf %67, %70 : vector<8x128xf32>
    %c1 = arith.constant 1 : index
    %c0_41 = arith.constant 0 : index
    %c0_42 = arith.constant 0 : index
    %72 = vector.load %arg7[%c1, %c0_41, %c0_42] : memref<2x128x128xf32, #tpu.memory_space<vmem>>, vector<1x128x128xf32>
    %73 = vector.shape_cast %72 : vector<1x128x128xf32> to vector<128x128xf32>
    %cst_43 = arith.constant dense<0.000000e+00> : vector<8x128xf32>
    %74 = tpu.matmul %71, %73, %cst_43 {dimension_numbers = #tpu.dot_dimension_numbers<[1], [0], [0], [1], [0, 0, 1, 1], [], []>} : vector<8x128xf32>, vector<128x128xf32>, vector<8x128xf32> -> vector<8x128xf32>
    %c1_44 = arith.constant 1 : index
    %c0_45 = arith.constant 0 : index
    %c0_46 = arith.constant 0 : index
    %75 = vector.load %arg8[%c1_44, %c0_45, %c0_46] : memref<2x1x128xf32, #tpu.memory_space<vmem>>, vector<1x1x128xf32>
    %76 = vector.shape_cast %75 : vector<1x1x128xf32> to vector<1x128xf32>
    %77 = vector.broadcast %76 : vector<1x128xf32> to vector<8x128xf32>
    %78 = arith.addf %74, %77 : vector<8x128xf32>
    %79 = arith.negf %78 : vector<8x128xf32>
    %80 = math.exp %79 : vector<8x128xf32>
    %cst_47 = arith.constant 1.000000e+00 : f32
    %81 = vector.broadcast %cst_47 : f32 to vector<8x128xf32>
    %82 = arith.addf %81, %80 : vector<8x128xf32>
    %83 = arith.divf %81, %82 : vector<8x128xf32>
    %c1_48 = arith.constant 1 : index
    %c0_49 = arith.constant 0 : index
    %c0_50 = arith.constant 0 : index
    %84 = vector.load %arg9[%c1_48, %c0_49, %c0_50] : memref<2x128x128xf32, #tpu.memory_space<vmem>>, vector<1x128x128xf32>
    %85 = vector.shape_cast %84 : vector<1x128x128xf32> to vector<128x128xf32>
    %cst_51 = arith.constant dense<0.000000e+00> : vector<8x128xf32>
    %86 = tpu.matmul %71, %85, %cst_51 {dimension_numbers = #tpu.dot_dimension_numbers<[1], [0], [0], [1], [0, 0, 1, 1], [], []>} : vector<8x128xf32>, vector<128x128xf32>, vector<8x128xf32> -> vector<8x128xf32>
    %c1_52 = arith.constant 1 : index
    %c0_53 = arith.constant 0 : index
    %c0_54 = arith.constant 0 : index
    %87 = vector.load %arg10[%c1_52, %c0_53, %c0_54] : memref<2x1x128xf32, #tpu.memory_space<vmem>>, vector<1x1x128xf32>
    %88 = vector.shape_cast %87 : vector<1x1x128xf32> to vector<1x128xf32>
    %89 = vector.broadcast %88 : vector<1x128xf32> to vector<8x128xf32>
    %90 = arith.addf %86, %89 : vector<8x128xf32>
    %91 = arith.mulf %83, %90 : vector<8x128xf32>
    %cst_55 = arith.constant 1.000000e+00 : f32
    %92 = vector.broadcast %cst_55 : f32 to vector<8x128xf32>
    %93 = arith.subf %92, %83 : vector<8x128xf32>
    %94 = arith.mulf %93, %71 : vector<8x128xf32>
    %95 = arith.addf %91, %94 : vector<8x128xf32>
    %c0_56 = arith.constant 0 : index
    %c0_57 = arith.constant 0 : index
    %96 = vector.load %arg11[%c0_56, %c0_57] : memref<8x128xf32, #tpu.memory_space<vmem>>, vector<8x128xf32>
    tpu.vector_store %arg11[%c0_56, %c0_57], %95 {strides = array<i32>} : memref<8x128xf32, #tpu.memory_space<vmem>>, vector<8x128xf32>,
    return
  }
  func.func @transform_0(%arg0: i32) -> (i32, i32) {
    %c0_i32 = arith.constant 0 : i32
    %c0_i32_0 = arith.constant 0 : i32
    return %arg0, %c0_i32 : i32, i32
  }
  func.func @transform_1(%arg0: i32) -> (i32, i32) {
    %c0_i32 = arith.constant 0 : i32
    %c0_i32_0 = arith.constant 0 : i32
    return %arg0, %c0_i32 : i32, i32
  }
  func.func @transform_2(%arg0: i32) -> (i32, i32) {
    %c0_i32 = arith.constant 0 : i32
    %c0_i32_0 = arith.constant 0 : i32
    %c0_i32_1 = arith.constant 0 : i32
    return %c0_i32, %c0_i32_0 : i32, i32
  }
  func.func @transform_3(%arg0: i32) -> (i32, i32) {
    %c0_i32 = arith.constant 0 : i32
    %c0_i32_0 = arith.constant 0 : i32
    %c0_i32_1 = arith.constant 0 : i32
    return %c0_i32, %c0_i32_0 : i32, i32
  }
  func.func @transform_4(%arg0: i32) -> (i32, i32) {
    %c0_i32 = arith.constant 0 : i32
    %c0_i32_0 = arith.constant 0 : i32
    %c0_i32_1 = arith.constant 0 : i32
    return %c0_i32, %c0_i32_0 : i32, i32
  }
  func.func @transform_5(%arg0: i32) -> (i32, i32) {
    %c0_i32 = arith.constant 0 : i32
    %c0_i32_0 = arith.constant 0 : i32
    %c0_i32_1 = arith.constant 0 : i32
    return %c0_i32, %c0_i32_0 : i32, i32
  }
  func.func @transform_6(%arg0: i32) -> (i32, i32, i32) {
    %c0_i32 = arith.constant 0 : i32
    %c0_i32_0 = arith.constant 0 : i32
    %c0_i32_1 = arith.constant 0 : i32
    %c0_i32_2 = arith.constant 0 : i32
    return %c0_i32, %c0_i32_0, %c0_i32_1 : i32, i32, i32
  }
  func.func @transform_7(%arg0: i32) -> (i32, i32, i32) {
    %c0_i32 = arith.constant 0 : i32
    %c0_i32_0 = arith.constant 0 : i32
    %c0_i32_1 = arith.constant 0 : i32
    %c0_i32_2 = arith.constant 0 : i32
    return %c0_i32, %c0_i32_0, %c0_i32_1 : i32, i32, i32
  }
  func.func @transform_8(%arg0: i32) -> (i32, i32, i32) {
    %c0_i32 = arith.constant 0 : i32
    %c0_i32_0 = arith.constant 0 : i32
    %c0_i32_1 = arith.constant 0 : i32
    %c0_i32_2 = arith.constant 0 : i32
    return %c0_i32, %c0_i32_0, %c0_i32_1 : i32, i32, i32
  }
  func.func @transform_9(%arg0: i32) -> (i32, i32, i32) {
    %c0_i32 = arith.constant 0 : i32
    %c0_i32_0 = arith.constant 0 : i32
    %c0_i32_1 = arith.constant 0 : i32
    %c0_i32_2 = arith.constant 0 : i32
    return %c0_i32, %c0_i32_0, %c0_i32_1 : i32, i32, i32
  }
  func.func @transform_10(%arg0: i32) -> (i32, i32) {
    %c0_i32 = arith.constant 0 : i32
    %c0_i32_0 = arith.constant 0 : i32
    return %arg0, %c0_i32 : i32, i32
  }
}

</mosaic_0001>

<llo_original>
// kernel: embedding_forward.1
$region0: #{embedding_forward.1}
  #allocation0 [shape = 'u32[]', space=smem, size = 0x4, offset = 0x4, fixed_abs, tag = 'smem constant byte address 0x4 - core index']
  #allocation1 [shape = 'u32[72,128]{1,0:T(1,128)}', space=vmem, size = 0x9000, scoped, tag = 'internal scratch']
  %s0 = inlined_call_operand.vmem [shape: f32[16,256], index: 0, kind: input, shape index: {}]
  %s1 = inlined_call_operand.vmem [shape: f32[16,32], index: 1, kind: input, shape index: {}]
  %s2 = inlined_call_operand.vmem [shape: f32[80,128], index: 2, kind: input, shape index: {}]
  %s3 = inlined_call_operand.vmem [shape: f32[1,128], index: 3, kind: input, shape index: {}]
  %s4 = inlined_call_operand.vmem [shape: f32[128,128], index: 4, kind: input, shape index: {}]
  %s5 = inlined_call_operand.vmem [shape: f32[32,128], index: 5, kind: input, shape index: {}]
  %s6 = inlined_call_operand.vmem [shape: f32[2,128,128], index: 6, kind: input, shape index: {}]
  %s7 = inlined_call_operand.vmem [shape: f32[2,1,128], index: 7, kind: input, shape index: {}]
  %s8 = inlined_call_operand.vmem [shape: f32[2,128,128], index: 8, kind: input, shape index: {}]
  %s9 = inlined_call_operand.vmem [shape: f32[2,1,128], index: 9, kind: input, shape index: {}]
  %s10 = inlined_call_operand.vmem [shape: f32[16,128], index: 10, kind: output, shape index: {}]
  %s11 = sld [smem:[#allocation0]]
  $region73: #{embedding_forward.1} parent=0
    _
  %s13 = ssub.s32 1, %s11
  %s14 = scalar_select 0, %s13, %s11
  loop: start=0, step=1, limit=4
  $region2: #{embedding_forward.1} parent=0 // loop_pre_header
    _
  $region3: #{embedding_forward.1} parent=0 // loop_header
    %s16 = sphi 0, %s20
    %p17 = scmp.ge.s32.totalorder %s16, 4
    %s26 = sphi 0, %s28
    %s29 = sphi 0, %s26
    %s30 = sphi 0, %s29
    %s46 = sphi 0, %s30
    %s52 = sphi 0, %s54
    %s55 = sphi 0, %s52
    %s56 = sphi 0, %s55
    %s72 = sphi 0, %s56
    %s76 = sphi 0, %s76
    %s78 = sphi 0, %s76
    %s79 = sphi 0, %s78
    %s93 = sphi 0, %s79
    %s97 = sphi 0, %s97
    %s99 = sphi 0, %s97
    %s100 = sphi 0, %s99
    %s114 = sphi 0, %s100
    %s118 = sphi 0, %s118
    %s120 = sphi 0, %s118
    %s121 = sphi 0, %s120
    %s135 = sphi 0, %s121
    %s139 = sphi 0, %s139
    %s141 = sphi 0, %s139
    %s142 = sphi 0, %s141
    %s156 = sphi 0, %s142
    %s160 = sphi 0, %s160
    %s162 = sphi 0, %s160
    %s163 = sphi 0, %s162
    %s177 = sphi 0, %s163
    %s181 = sphi 0, %s181
    %s183 = sphi 0, %s181
    %s184 = sphi 0, %s183
    %s198 = sphi 0, %s184
    %s202 = sphi 0, %s202
    %s204 = sphi 0, %s202
    %s205 = sphi 0, %s204
    %s219 = sphi 0, %s205
    %s223 = sphi 0, %s223
    %s225 = sphi 0, %s223
    %s226 = sphi 0, %s225
    %s240 = sphi 0, %s226
    %s246 = sphi 0, %s248
    %s249 = sphi 0, %s246
    %s250 = sphi 0, %s249
    %s266 = sphi 0, %s250
  $region4: #{embedding_forward.1} parent=0 // loop_header_branch
    %19 = sbr.rel (%p17) target = $region8
  $region5: #{embedding_forward.1} parent=0 // loop_body
    %s21 = ssub.s32 %s16, 1
    %s22 = ssub.s32 %s16, 2
    %s23 = sadd.s32 %s16, 1
    %s24 = ssub.s32 %s16, %s23
    %p25 = scmp.eq.s32.totalorder %s24, 0
    %s27 = sadd.s32 %s26, 1
    %s28 = scalar_select %p25, %s26, %s27
    %p31 = pneg %p25
    %p32 = scmp.eq.s32.totalorder %s16, 1
    %p33 = por %p31, %p32
    %p34 = scmp.ne.s32.totalorder %s26, %s29
    %p35 = scmp.eq.s32.totalorder %s16, 0
    %p36 = por %p34, %p35
    %p37 = scmp.ne.s32.totalorder %s26, %s29
    %p38 = scmp.eq.s32.totalorder %s21, 1
    %p39 = por %p37, %p38
    %p40 = scmp.ne.s32.totalorder %s29, %s30
    %p41 = scmp.eq.s32.totalorder %s21, 0
    %p42 = por %p40, %p41
    %p43 = scmp.ne.s32.totalorder %s29, %s30
    %p44 = scmp.eq.s32.totalorder %s22, 1
    %p45 = por %p43, %p44
    %p47 = scmp.ne.s32.totalorder %s30, %s46
    %p48 = scmp.eq.s32.totalorder %s22, 0
    %p49 = por %p47, %p48
    %s50 = ssub.s32 %s16, %s23
    %p51 = scmp.eq.s32.totalorder %s50, 0
    %s53 = sadd.s32 %s52, 1
    %s54 = scalar_select %p51, %s52, %s53
    %p57 = pneg %p51
    %p58 = scmp.eq.s32.totalorder %s16, 1
    %p59 = por %p57, %p58
    %p60 = scmp.ne.s32.totalorder %s52, %s55
    %p61 = scmp.eq.s32.totalorder %s16, 0
    %p62 = por %p60, %p61
    %p63 = scmp.ne.s32.totalorder %s52, %s55
    %p64 = scmp.eq.s32.totalorder %s21, 1
    %p65 = por %p63, %p64
    %p66 = scmp.ne.s32.totalorder %s55, %s56
    %p67 = scmp.eq.s32.totalorder %s21, 0
    %p68 = por %p66, %p67
    %p69 = scmp.ne.s32.totalorder %s55, %s56
    %p70 = scmp.eq.s32.totalorder %s22, 1
    %p71 = por %p69, %p70
    %p73 = scmp.ne.s32.totalorder %s56, %s72
    %p74 = scmp.eq.s32.totalorder %s22, 0
    %p75 = por %p73, %p74
    %s77 = sadd.s32 %s76, 1
    %p80 = scmp.eq.s32.totalorder %s16, 1
    %p81 = scmp.ne.s32.totalorder %s76, %s78
    %p82 = scmp.eq.s32.totalorder %s16, 0
    %p83 = por %p81, %p82
    %p84 = scmp.ne.s32.totalorder %s76, %s78
    %p85 = scmp.eq.s32.totalorder %s21, 1
    %p86 = por %p84, %p85
    %p87 = scmp.ne.s32.totalorder %s78, %s79
    %p88 = scmp.eq.s32.totalorder %s21, 0
    %p89 = por %p87, %p88
    %p90 = scmp.ne.s32.totalorder %s78, %s79
    %p91 = scmp.eq.s32.totalorder %s22, 1
    %p92 = por %p90, %p91
    %p94 = scmp.ne.s32.totalorder %s79, %s93
    %p95 = scmp.eq.s32.totalorder %s22, 0
    %p96 = por %p94, %p95
    %s98 = sadd.s32 %s97, 1
    %p101 = scmp.eq.s32.totalorder %s16, 1
    %p102 = scmp.ne.s32.totalorder %s97, %s99
    %p103 = scmp.eq.s32.totalorder %s16, 0
    %p104 = por %p102, %p103
    %p105 = scmp.ne.s32.totalorder %s97, %s99
    %p106 = scmp.eq.s32.totalorder %s21, 1
    %p107 = por %p105, %p106
    %p108 = scmp.ne.s32.totalorder %s99, %s100
    %p109 = scmp.eq.s32.totalorder %s21, 0
    %p110 = por %p108, %p109
    %p111 = scmp.ne.s32.totalorder %s99, %s100
    %p112 = scmp.eq.s32.totalorder %s22, 1
    %p113 = por %p111, %p112
    %p115 = scmp.ne.s32.totalorder %s100, %s114
    %p116 = scmp.eq.s32.totalorder %s22, 0
    %p117 = por %p115, %p116
    %s119 = sadd.s32 %s118, 1
    %p122 = scmp.eq.s32.totalorder %s16, 1
    %p123 = scmp.ne.s32.totalorder %s118, %s120
    %p124 = scmp.eq.s32.totalorder %s16, 0
    %p125 = por %p123, %p124
    %p126 = scmp.ne.s32.totalorder %s118, %s120
    %p127 = scmp.eq.s32.totalorder %s21, 1
    %p128 = por %p126, %p127
    %p129 = scmp.ne.s32.totalorder %s120, %s121
    %p130 = scmp.eq.s32.totalorder %s21, 0
    %p131 = por %p129, %p130
    %p132 = scmp.ne.s32.totalorder %s120, %s121
    %p133 = scmp.eq.s32.totalorder %s22, 1
    %p134 = por %p132, %p133
    %p136 = scmp.ne.s32.totalorder %s121, %s135
    %p137 = scmp.eq.s32.totalorder %s22, 0
    %p138 = por %p136, %p137
    %s140 = sadd.s32 %s139, 1
    %p143 = scmp.eq.s32.totalorder %s16, 1
    %p144 = scmp.ne.s32.totalorder %s139, %s141
    %p145 = scmp.eq.s32.totalorder %s16, 0
    %p146 = por %p144, %p145
    %p147 = scmp.ne.s32.totalorder %s139, %s141
    %p148 = scmp.eq.s32.totalorder %s21, 1
    %p149 = por %p147, %p148
    %p150 = scmp.ne.s32.totalorder %s141, %s142
    %p151 = scmp.eq.s32.totalorder %s21, 0
    %p152 = por %p150, %p151
    %p153 = scmp.ne.s32.totalorder %s141, %s142
    %p154 = scmp.eq.s32.totalorder %s22, 1
    %p155 = por %p153, %p154
    %p157 = scmp.ne.s32.totalorder %s142, %s156
    %p158 = scmp.eq.s32.totalorder %s22, 0
    %p159 = por %p157, %p158
    %s161 = sadd.s32 %s160, 1
    %p164 = scmp.eq.s32.totalorder %s16, 1
    %p165 = scmp.ne.s32.totalorder %s160, %s162
    %p166 = scmp.eq.s32.totalorder %s16, 0
    %p167 = por %p165, %p166
    %p168 = scmp.ne.s32.totalorder %s160, %s162
    %p169 = scmp.eq.s32.totalorder %s21, 1
    %p170 = por %p168, %p169
    %p171 = scmp.ne.s32.totalorder %s162, %s163
    %p172 = scmp.eq.s32.totalorder %s21, 0
    %p173 = por %p171, %p172
    %p174 = scmp.ne.s32.totalorder %s162, %s163
    %p175 = scmp.eq.s32.totalorder %s22, 1
    %p176 = por %p174, %p175
    %p178 = scmp.ne.s32.totalorder %s163, %s177
    %p179 = scmp.eq.s32.totalorder %s22, 0
    %p180 = por %p178, %p179
    %s182 = sadd.s32 %s181, 1
    %p185 = scmp.eq.s32.totalorder %s16, 1
    %p186 = scmp.ne.s32.totalorder %s181, %s183
    %p187 = scmp.eq.s32.totalorder %s16, 0
    %p188 = por %p186, %p187
    %p189 = scmp.ne.s32.totalorder %s181, %s183
    %p190 = scmp.eq.s32.totalorder %s21, 1
    %p191 = por %p189, %p190
    %p192 = scmp.ne.s32.totalorder %s183, %s184
    %p193 = scmp.eq.s32.totalorder %s21, 0
    %p194 = por %p192, %p193
    %p195 = scmp.ne.s32.totalorder %s183, %s184
    %p196 = scmp.eq.s32.totalorder %s22, 1
    %p197 = por %p195, %p196
    %p199 = scmp.ne.s32.totalorder %s184, %s198
    %p200 = scmp.eq.s32.totalorder %s22, 0
    %p201 = por %p199, %p200
    %s203 = sadd.s32 %s202, 1
    %p206 = scmp.eq.s32.totalorder %s16, 1
    %p207 = scmp.ne.s32.totalorder %s202, %s204
    %p208 = scmp.eq.s32.totalorder %s16, 0
    %p209 = por %p207, %p208
    %p210 = scmp.ne.s32.totalorder %s202, %s204
    %p211 = scmp.eq.s32.totalorder %s21, 1
    %p212 = por %p210, %p211
    %p213 = scmp.ne.s32.totalorder %s204, %s205
    %p214 = scmp.eq.s32.totalorder %s21, 0
    %p215 = por %p213, %p214
    %p216 = scmp.ne.s32.totalorder %s204, %s205
    %p217 = scmp.eq.s32.totalorder %s22, 1
    %p218 = por %p216, %p217
    %p220 = scmp.ne.s32.totalorder %s205, %s219
    %p221 = scmp.eq.s32.totalorder %s22, 0
    %p222 = por %p220, %p221
    %s224 = sadd.s32 %s223, 1
    %p227 = scmp.eq.s32.totalorder %s16, 1
    %p228 = scmp.ne.s32.totalorder %s223, %s225
    %p229 = scmp.eq.s32.totalorder %s16, 0
    %p230 = por %p228, %p229
    %p231 = scmp.ne.s32.totalorder %s223, %s225
    %p232 = scmp.eq.s32.totalorder %s21, 1
    %p233 = por %p231, %p232
    %p234 = scmp.ne.s32.totalorder %s225, %s226
    %p235 = scmp.eq.s32.totalorder %s21, 0
    %p236 = por %p234, %p235
    %p237 = scmp.ne.s32.totalorder %s225, %s226
    %p238 = scmp.eq.s32.totalorder %s22, 1
    %p239 = por %p237, %p238
    %p241 = scmp.ne.s32.totalorder %s226, %s240
    %p242 = scmp.eq.s32.totalorder %s22, 0
    %p243 = por %p241, %p242
    %s244 = ssub.s32 %s16, %s23
    %p245 = scmp.eq.s32.totalorder %s244, 0
    %s247 = sadd.s32 %s246, 1
    %s248 = scalar_select %p245, %s246, %s247
    %p251 = pneg %p245
    %p252 = scmp.eq.s32.totalorder %s16, 1
    %p253 = por %p251, %p252
    %p254 = scmp.ne.s32.totalorder %s246, %s249
    %p255 = scmp.eq.s32.totalorder %s16, 0
    %p256 = por %p254, %p255
    %p257 = scmp.ne.s32.totalorder %s246, %s249
    %p258 = scmp.eq.s32.totalorder %s21, 1
    %p259 = por %p257, %p258
    %p260 = scmp.ne.s32.totalorder %s249, %s250
    %p261 = scmp.eq.s32.totalorder %s21, 0
    %p262 = por %p260, %p261
    %p263 = scmp.ne.s32.totalorder %s249, %s250
    %p264 = scmp.eq.s32.totalorder %s22, 1
    %p265 = por %p263, %p264
    %p267 = scmp.ne.s32.totalorder %s250, %s266
    %p268 = scmp.eq.s32.totalorder %s22, 0
    %p269 = por %p267, %p268
    %p270 = scmp.le.s32.totalorder 1, %s16
    %p271 = scmp.lt.s32.totalorder %s16, 3
    %p272 = pnand %p270, %p271
    %p273 = pneg %p272
    // Predicated region
    $region9: #{embedding_forward.1} parent=5 // pred_check
      _
    $region10: #{embedding_forward.1} parent=5 // pred_check_branch
      %275 = sbr.rel (%p272) target = $region12
    $region11: #{embedding_forward.1} parent=5 // pred_region
      %s276 = ssub.s32 %s16, 1
      // Predicated region
      $region13: #{embedding_forward.1} parent=11 // pred_check
        %p277 = pneg %p89
      $region14: #{embedding_forward.1} parent=11 // pred_check_branch
        %279 = sbr.rel (%p277) target = $region16
      $region15: #{embedding_forward.1} parent=11 // pred_region
        _
      $region16: #{embedding_forward.1} parent=11 // pred_fallthru
        _
      // Predicated region
      $region17: #{embedding_forward.1} parent=11 // pred_check
        %p280 = pneg %p110
      $region18: #{embedding_forward.1} parent=11 // pred_check_branch
        %282 = sbr.rel (%p280) target = $region20
      $region19: #{embedding_forward.1} parent=11 // pred_region
        _
      $region20: #{embedding_forward.1} parent=11 // pred_fallthru
        _
      // Predicated region
      $region21: #{embedding_forward.1} parent=11 // pred_check
        %p283 = pneg %p131
      $region22: #{embedding_forward.1} parent=11 // pred_check_branch
        %285 = sbr.rel (%p283) target = $region24
      $region23: #{embedding_forward.1} parent=11 // pred_region
        _
      $region24: #{embedding_forward.1} parent=11 // pred_fallthru
        _
      // Predicated region
      $region25: #{embedding_forward.1} parent=11 // pred_check
        %p286 = pneg %p152
      $region26: #{embedding_forward.1} parent=11 // pred_check_branch
        %288 = sbr.rel (%p286) target = $region28
      $region27: #{embedding_forward.1} parent=11 // pred_region
        _
      $region28: #{embedding_forward.1} parent=11 // pred_fallthru
        _
      // Predicated region
      $region29: #{embedding_forward.1} parent=11 // pred_check
        %p289 = pneg %p173
      $region30: #{embedding_forward.1} parent=11 // pred_check_branch
        %291 = sbr.rel (%p289) target = $region32
      $region31: #{embedding_forward.1} parent=11 // pred_region
        _
      $region32: #{embedding_forward.1} parent=11 // pred_fallthru
        _
      // Predicated region
      $region33: #{embedding_forward.1} parent=11 // pred_check
        %p292 = pneg %p194
      $region34: #{embedding_forward.1} parent=11 // pred_check_branch
        %294 = sbr.rel (%p292) target = $region36
      $region35: #{embedding_forward.1} parent=11 // pred_region
        _
      $region36: #{embedding_forward.1} parent=11 // pred_fallthru
        _
      // Predicated region
      $region37: #{embedding_forward.1} parent=11 // pred_check
        %p295 = pneg %p215
      $region38: #{embedding_forward.1} parent=11 // pred_check_branch
        %297 = sbr.rel (%p295) target = $region40
      $region39: #{embedding_forward.1} parent=11 // pred_region
        _
      $region40: #{embedding_forward.1} parent=11 // pred_fallthru
        _
      // Predicated region
      $region41: #{embedding_forward.1} parent=11 // pred_check
        %p298 = pneg %p236
      $region42: #{embedding_forward.1} parent=11 // pred_check_branch
        %300 = sbr.rel (%p298) target = $region44
      $region43: #{embedding_forward.1} parent=11 // pred_region
        _
      $region44: #{embedding_forward.1} parent=11 // pred_fallthru
        _
    $region12: #{embedding_forward.1} parent=5 // pred_fallthru
      _
    %p301 = scmp.lt.s32.totalorder %s16, 2
    // Predicated region
    $region45: #{embedding_forward.1} parent=5 // pred_check
      %p302 = pneg %p301
    $region46: #{embedding_forward.1} parent=5 // pred_check_branch
      %304 = sbr.rel (%p302) target = $region48
    $region47: #{embedding_forward.1} parent=5 // pred_region
      // Predicated region
      $region49: #{embedding_forward.1} parent=47 // pred_check
        %p305 = pneg %p36
      $region50: #{embedding_forward.1} parent=47 // pred_check_branch
        %307 = sbr.rel (%p305) target = $region52
      $region51: #{embedding_forward.1} parent=47 // pred_region
        %p308 = scmp.lt.s32.totalorder %s16, 1
        %s309 = scalar_select %p308, %s16, 1
        %s310 = smul.addr %s309, 2
        %s311 = smul.addr %s310, 8
        %s312 = scalar_lea.vmem %s0, %s311
      $region52: #{embedding_forward.1} parent=47 // pred_fallthru
        _
      // Predicated region
      $region53: #{embedding_forward.1} parent=47 // pred_check
        %p313 = pneg %p62
      $region54: #{embedding_forward.1} parent=47 // pred_check_branch
        %315 = sbr.rel (%p313) target = $region56
      $region55: #{embedding_forward.1} parent=47 // pred_region
        %p316 = scmp.lt.s32.totalorder %s16, 1
        %s317 = scalar_select %p316, %s16, 1
        %s318 = smul.addr %s317, 8
        %s319 = scalar_lea.vmem %s1, %s318
      $region56: #{embedding_forward.1} parent=47 // pred_fallthru
        _
    $region48: #{embedding_forward.1} parent=5 // pred_fallthru
      _
    %p320 = scmp.le.s32.totalorder 1, %s16
    %p321 = scmp.lt.s32.totalorder %s16, 3
    %p322 = pnand %p320, %p321
    %p323 = pneg %p322
    // Predicated region
    $region57: #{embedding_forward.1} parent=5 // pred_check
      _
    $region58: #{embedding_forward.1} parent=5 // pred_check_branch
      %325 = sbr.rel (%p322) target = $region60
    $region59: #{embedding_forward.1} parent=5 // pred_region
      %s326 = ssub.s32 %s16, 1
      %p327 = scmp.lt.s32.totalorder %s21, 1
      %s328 = scalar_select %p327, %s21, 1
      %s329 = smul.addr %s328, 2
      %s330 = smul.addr %s329, 8
      %s331 = scalar_lea.vmem %s0, %s330
      %p332 = pneg %p42
      %p333 = pneg %p39
      %p334 = scmp.lt.s32.totalorder %s21, 1
      %s335 = scalar_select %p334, %s21, 1
      %s336 = smul.addr %s335, 8
      %s337 = scalar_lea.vmem %s1, %s336
      %p338 = pneg %p68
      %p339 = pneg %p65
      %p340 = pneg %p89
      %p341 = pneg %p86
      %p342 = pneg %p110
      %p343 = pneg %p107
      %p344 = pneg %p131
      %p345 = pneg %p128
      %p346 = pneg %p152
      %p347 = pneg %p149
      %p348 = pneg %p173
      %p349 = pneg %p170
      %p350 = pneg %p194
      %p351 = pneg %p191
      %p352 = pneg %p215
      %p353 = pneg %p212
      %p354 = pneg %p236
      %p355 = pneg %p233
      %p356 = pneg %p262
      %p357 = pneg %p259
      %p358 = scmp.lt.s32.totalorder %s21, 1
      %s359 = scalar_select %p358, %s21, 1
      %s360 = smul.addr %s359, 8
      %s361 = scalar_lea.vmem %s10, %s360
      %p362 = scmp.lt.s32.totalorder %s21, 1
      %s363 = scalar_select %p362, %s21, 1
      %s364 = smul.addr %s363, 2
      %s365 = smul.addr %s364, 8
      %s366 = scalar_lea.vmem %s0, %s365
      %p367 = scmp.lt.s32.totalorder %s21, 1
      %s368 = scalar_select %p367, %s21, 1
      %s369 = smul.addr %s368, 8
      %s370 = scalar_lea.vmem %s1, %s369
      %p371 = scmp.lt.s32.totalorder %s21, 1
      %s372 = scalar_select %p371, %s21, 1
      %s373 = smul.addr %s372, 8
      %s374 = scalar_lea.vmem %s10, %s373
      %v375 = vld [vmem:[%s366] sm:$0xff]
      %v376 = vld [vmem:[%s366 + $0x8] sm:$0xff]
      %v377 = vld [vmem:[%s2] sm:$0xff]
      %v378 = vld [vmem:[%s2 + $0x8] sm:$0xff]
      %v379 = vld [vmem:[%s2 + $0x10] sm:$0xff]
      %v380 = vld [vmem:[%s2 + $0x18] sm:$0xff]
      %v381 = vld [vmem:[%s2 + $0x20] sm:$0xff]
      %v382 = vld [vmem:[%s2 + $0x28] sm:$0xff]
      %v383 = vld [vmem:[%s2 + $0x30] sm:$0xff]
      %v384 = vld [vmem:[%s2 + $0x38] sm:$0xff]
      %v385 = vld [vmem:[%s2 + $0x40] sm:$0xff]
      %v386 = vld [vmem:[%s2 + $0x48] sm:$0xff]
      %vm387 = vcmask 654336
      %v389 = vsel %vm387, %v375, 0
      %391 = vmatpush.msra.mxu0 0.0
      %392 = vmatpush.msra.mxu0 0.0
      %393 = vmatpush.msra.mxu0 0.0
      %394 = vmatpush.msra.mxu0 0.0
      %395 = vmatpush.msra.mxu0 0.0
      %396 = vmatpush.msra.mxu0 0.0
      %397 = vmatpush.msra.mxu0 %v386
      %398 = vmatpush.msra.mxu0 %v385
      %399 = vmatpush.msra.mxu0 %v384
      %400 = vmatpush.msra.mxu0 %v383
      %401 = vmatpush.msra.mxu0 %v382
      %402 = vmatpush.msra.mxu0 %v381
      %403 = vmatpush.msra.mxu0 %v380
      %404 = vmatpush.msra.mxu0 %v379
      %405 = vmatpush.msra.mxu0 %v378
      %406 = vmatpush.msra.mxu0 %v377
      %407 = vmatmul.f32.gmra.mxu0 %v389
      %v408 = vpop.f32.mrf.mxu0
      %v409 = vadd.f32 0.0, %v408
      %410 = vdwg.mxu0
      %411 = vrot.lane.b32.xlu0 %v375, 112
      %v412 = vpop.permute.xlu0 %411
      %v413 = vsel %vm387, %v412, 0
      %415 = vmatpush.msra.mxu0 0.0
      %416 = vmatpush.msra.mxu0 0.0
      %417 = vmatpush.msra.mxu0 0.0
      %418 = vmatpush.msra.mxu0 0.0
      %419 = vmatpush.msra.mxu0 0.0
      %420 = vmatpush.msra.mxu0 0.0
      %421 = vmatpush.msra.mxu0 %v386
      %422 = vmatpush.msra.mxu0 %v385
      %423 = vmatpush.msra.mxu0 %v384
      %424 = vmatpush.msra.mxu0 %v383
      %425 = vmatpush.msra.mxu0 %v382
      %426 = vmatpush.msra.mxu0 %v381
      %427 = vmatpush.msra.mxu0 %v380
      %428 = vmatpush.msra.mxu0 %v379
      %429 = vmatpush.msra.mxu0 %v378
      %430 = vmatpush.msra.mxu0 %v377
      %431 = vmatmul.f32.gmra.mxu0 %v413
      %v432 = vpop.f32.mrf.mxu0
      %v433 = vadd.f32 0.0, %v432
      %434 = vdwg.mxu0
      %v435 = vmax.f32 %v409, %v433
      %436 = vrot.lane.b32.xlu0 %v375, 96
      %v437 = vpop.permute.xlu0 %436
      %v438 = vsel %vm387, %v437, 0
      %440 = vmatpush.msra.mxu0 0.0
      %441 = vmatpush.msra.mxu0 0.0
      %442 = vmatpush.msra.mxu0 0.0
      %443 = vmatpush.msra.mxu0 0.0
      %444 = vmatpush.msra.mxu0 0.0
      %445 = vmatpush.msra.mxu0 0.0
      %446 = vmatpush.msra.mxu0 %v386
      %447 = vmatpush.msra.mxu0 %v385
      %448 = vmatpush.msra.mxu0 %v384
      %449 = vmatpush.msra.mxu0 %v383
      %450 = vmatpush.msra.mxu0 %v382
      %451 = vmatpush.msra.mxu0 %v381
      %452 = vmatpush.msra.mxu0 %v380
      %453 = vmatpush.msra.mxu0 %v379
      %454 = vmatpush.msra.mxu0 %v378
      %455 = vmatpush.msra.mxu0 %v377
      %456 = vmatmul.f32.gmra.mxu0 %v438
      %v457 = vpop.f32.mrf.mxu0
      %v458 = vadd.f32 0.0, %v457
      %459 = vdwg.mxu0
      %v460 = vmax.f32 %v435, %v458
      %461 = vrot.lane.b32.xlu0 %v375, 80
      %v462 = vpop.permute.xlu0 %461
      %v463 = vsel %vm387, %v462, 0
      %465 = vmatpush.msra.mxu0 0.0
      %466 = vmatpush.msra.mxu0 0.0
      %467 = vmatpush.msra.mxu0 0.0
      %468 = vmatpush.msra.mxu0 0.0
      %469 = vmatpush.msra.mxu0 0.0
      %470 = vmatpush.msra.mxu0 0.0
      %471 = vmatpush.msra.mxu0 %v386
      %472 = vmatpush.msra.mxu0 %v385
      %473 = vmatpush.msra.mxu0 %v384
      %474 = vmatpush.msra.mxu0 %v383
      %475 = vmatpush.msra.mxu0 %v382
      %476 = vmatpush.msra.mxu0 %v381
      %477 = vmatpush.msra.mxu0 %v380
      %478 = vmatpush.msra.mxu0 %v379
      %479 = vmatpush.msra.mxu0 %v378
      %480 = vmatpush.msra.mxu0 %v377
      %481 = vmatmul.f32.gmra.mxu0 %v463
      %v482 = vpop.f32.mrf.mxu0
      %v483 = vadd.f32 0.0, %v482
      %484 = vdwg.mxu0
      %v485 = vmax.f32 %v460, %v483
      %487 = vrot.lane.b32.xlu0 %v375, 64
      %v488 = vpop.permute.xlu0 %487
      %489 = vrot.lane.b32.xlu0 %v376, 64
      %v490 = vpop.permute.xlu0 %489
      %vm491 = vcmask 523264
      %v492 = vsel %vm491, %v488, %v490
      %v493 = vsel %vm387, %v492, 0
      %495 = vmatpush.msra.mxu0 0.0
      %496 = vmatpush.msra.mxu0 0.0
      %497 = vmatpush.msra.mxu0 0.0
      %498 = vmatpush.msra.mxu0 0.0
      %499 = vmatpush.msra.mxu0 0.0
      %500 = vmatpush.msra.mxu0 0.0
      %501 = vmatpush.msra.mxu0 %v386
      %502 = vmatpush.msra.mxu0 %v385
      %503 = vmatpush.msra.mxu0 %v384
      %504 = vmatpush.msra.mxu0 %v383
      %505 = vmatpush.msra.mxu0 %v382
      %506 = vmatpush.msra.mxu0 %v381
      %507 = vmatpush.msra.mxu0 %v380
      %508 = vmatpush.msra.mxu0 %v379
      %509 = vmatpush.msra.mxu0 %v378
      %510 = vmatpush.msra.mxu0 %v377
      %511 = vmatmul.f32.gmra.mxu0 %v493
      %v512 = vpop.f32.mrf.mxu0
      %v513 = vadd.f32 0.0, %v512
      %514 = vdwg.mxu0
      %v515 = vmax.f32 %v485, %v513
      %516 = vrot.lane.b32.xlu0 %v375, 48
      %v517 = vpop.permute.xlu0 %516
      %518 = vrot.lane.b32.xlu0 %v376, 48
      %v519 = vpop.permute.xlu0 %518
      %vm520 = vcmask 392192
      %v521 = vsel %vm520, %v517, %v519
      %v522 = vsel %vm387, %v521, 0
      %524 = vmatpush.msra.mxu0 0.0
      %525 = vmatpush.msra.mxu0 0.0
      %526 = vmatpush.msra.mxu0 0.0
      %527 = vmatpush.msra.mxu0 0.0
      %528 = vmatpush.msra.mxu0 0.0
      %529 = vmatpush.msra.mxu0 0.0
      %530 = vmatpush.msra.mxu0 %v386
      %531 = vmatpush.msra.mxu0 %v385
      %532 = vmatpush.msra.mxu0 %v384
      %533 = vmatpush.msra.mxu0 %v383
      %534 = vmatpush.msra.mxu0 %v382
      %535 = vmatpush.msra.mxu0 %v381
      %536 = vmatpush.msra.mxu0 %v380
      %537 = vmatpush.msra.mxu0 %v379
      %538 = vmatpush.msra.mxu0 %v378
      %539 = vmatpush.msra.mxu0 %v377
      %540 = vmatmul.f32.gmra.mxu0 %v522
      %v541 = vpop.f32.mrf.mxu0
      %v542 = vadd.f32 0.0, %v541
      %543 = vdwg.mxu0
      %v544 = vmax.f32 %v515, %v542
      %545 = vrot.lane.b32.xlu0 %v375, 32
      %v546 = vpop.permute.xlu0 %545
      %547 = vrot.lane.b32.xlu0 %v376, 32
      %v548 = vpop.permute.xlu0 %547
      %vm549 = vcmask 261120
      %v550 = vsel %vm549, %v546, %v548
      %v551 = vsel %vm387, %v550, 0
      %553 = vmatpush.msra.mxu0 0.0
      %554 = vmatpush.msra.mxu0 0.0
      %555 = vmatpush.msra.mxu0 0.0
      %556 = vmatpush.msra.mxu0 0.0
      %557 = vmatpush.msra.mxu0 0.0
      %558 = vmatpush.msra.mxu0 0.0
      %559 = vmatpush.msra.mxu0 %v386
      %560 = vmatpush.msra.mxu0 %v385
      %561 = vmatpush.msra.mxu0 %v384
      %562 = vmatpush.msra.mxu0 %v383
      %563 = vmatpush.msra.mxu0 %v382
      %564 = vmatpush.msra.mxu0 %v381
      %565 = vmatpush.msra.mxu0 %v380
      %566 = vmatpush.msra.mxu0 %v379
      %567 = vmatpush.msra.mxu0 %v378
      %568 = vmatpush.msra.mxu0 %v377
      %569 = vmatmul.f32.gmra.mxu0 %v551
      %v570 = vpop.f32.mrf.mxu0
      %v571 = vadd.f32 0.0, %v570
      %572 = vdwg.mxu0
      %v573 = vmax.f32 %v544, %v571
      %574 = vrot.lane.b32.xlu0 %v375, 16
      %v575 = vpop.permute.xlu0 %574
      %576 = vrot.lane.b32.xlu0 %v376, 16
      %v577 = vpop.permute.xlu0 %576
      %vm578 = vcmask 130048
      %v579 = vsel %vm578, %v575, %v577
      %v580 = vsel %vm387, %v579, 0
      %582 = vmatpush.msra.mxu0 0.0
      %583 = vmatpush.msra.mxu0 0.0
      %584 = vmatpush.msra.mxu0 0.0
      %585 = vmatpush.msra.mxu0 0.0
      %586 = vmatpush.msra.mxu0 0.0
      %587 = vmatpush.msra.mxu0 0.0
      %588 = vmatpush.msra.mxu0 %v386
      %589 = vmatpush.msra.mxu0 %v385
      %590 = vmatpush.msra.mxu0 %v384
      %591 = vmatpush.msra.mxu0 %v383
      %592 = vmatpush.msra.mxu0 %v382
      %593 = vmatpush.msra.mxu0 %v381
      %594 = vmatpush.msra.mxu0 %v380
      %595 = vmatpush.msra.mxu0 %v379
      %596 = vmatpush.msra.mxu0 %v378
      %597 = vmatpush.msra.mxu0 %v377
      %598 = vmatmul.f32.gmra.mxu0 %v580
      %v599 = vpop.f32.mrf.mxu0
      %v600 = vadd.f32 0.0, %v599
      %601 = vdwg.mxu0
      %v602 = vmax.f32 %v573, %v600
      %v603 = vsel %vm387, %v376, 0
      %605 = vmatpush.msra.mxu0 0.0
      %606 = vmatpush.msra.mxu0 0.0
      %607 = vmatpush.msra.mxu0 0.0
      %608 = vmatpush.msra.mxu0 0.0
      %609 = vmatpush.msra.mxu0 0.0
      %610 = vmatpush.msra.mxu0 0.0
      %611 = vmatpush.msra.mxu0 %v386
      %612 = vmatpush.msra.mxu0 %v385
      %613 = vmatpush.msra.mxu0 %v384
      %614 = vmatpush.msra.mxu0 %v383
      %615 = vmatpush.msra.mxu0 %v382
      %616 = vmatpush.msra.mxu0 %v381
      %617 = vmatpush.msra.mxu0 %v380
      %618 = vmatpush.msra.mxu0 %v379
      %619 = vmatpush.msra.mxu0 %v378
      %620 = vmatpush.msra.mxu0 %v377
      %621 = vmatmul.f32.gmra.mxu0 %v603
      %v622 = vpop.f32.mrf.mxu0
      %v623 = vadd.f32 0.0, %v622
      %624 = vdwg.mxu0
      %v625 = vmax.f32 %v602, %v623
      %626 = vrot.lane.b32.xlu0 %v376, 112
      %v627 = vpop.permute.xlu0 %626
      %v628 = vsel %vm387, %v627, 0
      %630 = vmatpush.msra.mxu0 0.0
      %631 = vmatpush.msra.mxu0 0.0
      %632 = vmatpush.msra.mxu0 0.0
      %633 = vmatpush.msra.mxu0 0.0
      %634 = vmatpush.msra.mxu0 0.0
      %635 = vmatpush.msra.mxu0 0.0
      %636 = vmatpush.msra.mxu0 %v386
      %637 = vmatpush.msra.mxu0 %v385
      %638 = vmatpush.msra.mxu0 %v384
      %639 = vmatpush.msra.mxu0 %v383
      %640 = vmatpush.msra.mxu0 %v382
      %641 = vmatpush.msra.mxu0 %v381
      %642 = vmatpush.msra.mxu0 %v380
      %643 = vmatpush.msra.mxu0 %v379
      %644 = vmatpush.msra.mxu0 %v378
      %645 = vmatpush.msra.mxu0 %v377
      %646 = vmatmul.f32.gmra.mxu0 %v628
      %v647 = vpop.f32.mrf.mxu0
      %v648 = vadd.f32 0.0, %v647
      %649 = vdwg.mxu0
      %v650 = vmax.f32 %v625, %v648
      %651 = vrot.lane.b32.xlu0 %v376, 96
      %v652 = vpop.permute.xlu0 %651
      %v653 = vsel %vm387, %v652, 0
      %655 = vmatpush.msra.mxu0 0.0
      %656 = vmatpush.msra.mxu0 0.0
      %657 = vmatpush.msra.mxu0 0.0
      %658 = vmatpush.msra.mxu0 0.0
      %659 = vmatpush.msra.mxu0 0.0
      %660 = vmatpush.msra.mxu0 0.0
      %661 = vmatpush.msra.mxu0 %v386
      %662 = vmatpush.msra.mxu0 %v385
      %663 = vmatpush.msra.mxu0 %v384
      %664 = vmatpush.msra.mxu0 %v383
      %665 = vmatpush.msra.mxu0 %v382
      %666 = vmatpush.msra.mxu0 %v381
      %667 = vmatpush.msra.mxu0 %v380
      %668 = vmatpush.msra.mxu0 %v379
      %669 = vmatpush.msra.mxu0 %v378
      %670 = vmatpush.msra.mxu0 %v377
      %671 = vmatmul.f32.gmra.mxu0 %v653
      %v672 = vpop.f32.mrf.mxu0
      %v673 = vadd.f32 0.0, %v672
      %674 = vdwg.mxu0
      %v675 = vmax.f32 %v650, %v673
      %676 = vrot.lane.b32.xlu0 %v376, 80
      %v677 = vpop.permute.xlu0 %676
      %v678 = vsel %vm387, %v677, 0
      %680 = vmatpush.msra.mxu0 0.0
      %681 = vmatpush.msra.mxu0 0.0
      %682 = vmatpush.msra.mxu0 0.0
      %683 = vmatpush.msra.mxu0 0.0
      %684 = vmatpush.msra.mxu0 0.0
      %685 = vmatpush.msra.mxu0 0.0
      %686 = vmatpush.msra.mxu0 %v386
      %687 = vmatpush.msra.mxu0 %v385
      %688 = vmatpush.msra.mxu0 %v384
      %689 = vmatpush.msra.mxu0 %v383
      %690 = vmatpush.msra.mxu0 %v382
      %691 = vmatpush.msra.mxu0 %v381
      %692 = vmatpush.msra.mxu0 %v380
      %693 = vmatpush.msra.mxu0 %v379
      %694 = vmatpush.msra.mxu0 %v378
      %695 = vmatpush.msra.mxu0 %v377
      %696 = vmatmul.f32.gmra.mxu0 %v678
      %v697 = vpop.f32.mrf.mxu0
      %v698 = vadd.f32 0.0, %v697
      %699 = vdwg.mxu0
      %v700 = vmax.f32 %v675, %v698
      %v701 = vld [vmem:[%s3] sm:$0x1]
      %v703 = vperm.slane %v701, 0
      %v705 = vadd.f32 %v700, %v703
      %v706 = vmax.f32 %v705, 0.0
      %v707 = vld [vmem:[%s4] sm:$0xff]
      %v708 = vld [vmem:[%s4 + $0x8] sm:$0xff]
      %v709 = vld [vmem:[%s4 + $0x10] sm:$0xff]
      %v710 = vld [vmem:[%s4 + $0x18] sm:$0xff]
      %v711 = vld [vmem:[%s4 + $0x20] sm:$0xff]
      %v712 = vld [vmem:[%s4 + $0x28] sm:$0xff]
      %v713 = vld [vmem:[%s4 + $0x30] sm:$0xff]
      %v714 = vld [vmem:[%s4 + $0x38] sm:$0xff]
      %v715 = vld [vmem:[%s4 + $0x40] sm:$0xff]
      %v716 = vld [vmem:[%s4 + $0x48] sm:$0xff]
      %v717 = vld [vmem:[%s4 + $0x50] sm:$0xff]
      %v718 = vld [vmem:[%s4 + $0x58] sm:$0xff]
      %v719 = vld [vmem:[%s4 + $0x60] sm:$0xff]
      %v720 = vld [vmem:[%s4 + $0x68] sm:$0xff]
      %v721 = vld [vmem:[%s4 + $0x70] sm:$0xff]
      %v722 = vld [vmem:[%s4 + $0x78] sm:$0xff]
      %v723 = vld [vmem:[%s370] sm:$0xff]
      %v724 = vld [vmem:[%s5] sm:$0xff]
      %v725 = vld [vmem:[%s5 + $0x8] sm:$0xff]
      %v726 = vld [vmem:[%s5 + $0x10] sm:$0xff]
      %v727 = vld [vmem:[%s5 + $0x18] sm:$0xff]
      %v729 = vsel %vm549, %v723, 0
      %731 = vmatpush.msra.mxu0 0.0
      %732 = vmatpush.msra.mxu0 0.0
      %733 = vmatpush.msra.mxu0 0.0
      %734 = vmatpush.msra.mxu0 0.0
      %735 = vmatpush.msra.mxu0 0.0
      %736 = vmatpush.msra.mxu0 0.0
      %737 = vmatpush.msra.mxu0 0.0
      %738 = vmatpush.msra.mxu0 0.0
      %739 = vmatpush.msra.mxu0 0.0
      %740 = vmatpush.msra.mxu0 0.0
      %741 = vmatpush.msra.mxu0 0.0
      %742 = vmatpush.msra.mxu0 0.0
      %743 = vmatpush.msra.mxu0 %v727
      %744 = vmatpush.msra.mxu0 %v726
      %745 = vmatpush.msra.mxu0 %v725
      %746 = vmatpush.msra.mxu0 %v724
      %747 = vmatmul.f32.gmra.mxu0 %v729
      %v748 = vpop.f32.mrf.mxu0
      %v749 = vadd.f32 0.0, %v748
      %750 = vdwg.mxu0
      %751 = vmatpush.msra.mxu0 %v722
      %752 = vmatpush.msra.mxu0 %v721
      %753 = vmatpush.msra.mxu0 %v720
      %754 = vmatpush.msra.mxu0 %v719
      %755 = vmatpush.msra.mxu0 %v718
      %756 = vmatpush.msra.mxu0 %v717
      %757 = vmatpush.msra.mxu0 %v716
      %758 = vmatpush.msra.mxu0 %v715
      %759 = vmatpush.msra.mxu0 %v714
      %760 = vmatpush.msra.mxu0 %v713
      %761 = vmatpush.msra.mxu0 %v712
      %762 = vmatpush.msra.mxu0 %v711
      %763 = vmatpush.msra.mxu0 %v710
      %764 = vmatpush.msra.mxu0 %v709
      %765 = vmatpush.msra.mxu0 %v708
      %766 = vmatpush.msra.mxu0 %v707
      %767 = vmatmul.f32.gmra.mxu0 %v706
      %v768 = vpop.f32.mrf.mxu0
      %v769 = vadd.f32 %v749, %v768
      %770 = vdwg.mxu0
      %v771 = vld [vmem:[%s6] sm:$0xff]
      %v772 = vld [vmem:[%s6 + $0x8] sm:$0xff]
      %v773 = vld [vmem:[%s6 + $0x10] sm:$0xff]
      %v774 = vld [vmem:[%s6 + $0x18] sm:$0xff]
      %v775 = vld [vmem:[%s6 + $0x20] sm:$0xff]
      %v776 = vld [vmem:[%s6 + $0x28] sm:$0xff]
      %v777 = vld [vmem:[%s6 + $0x30] sm:$0xff]
      %v778 = vld [vmem:[%s6 + $0x38] sm:$0xff]
      %v779 = vld [vmem:[%s6 + $0x40] sm:$0xff]
      %v780 = vld [vmem:[%s6 + $0x48] sm:$0xff]
      %v781 = vld [vmem:[%s6 + $0x50] sm:$0xff]
      %v782 = vld [vmem:[%s6 + $0x58] sm:$0xff]
      %v783 = vld [vmem:[%s6 + $0x60] sm:$0xff]
      %v784 = vld [vmem:[%s6 + $0x68] sm:$0xff]
      %v785 = vld [vmem:[%s6 + $0x70] sm:$0xff]
      %v786 = vld [vmem:[%s6 + $0x78] sm:$0xff]
      %v787 = vld [vmem:[%s7] sm:$0x1]
      %v789 = vperm.slane %v787, 0
      %791 = vmatpush.msra.mxu0 %v786
      %792 = vmatpush.msra.mxu0 %v785
      %793 = vmatpush.msra.mxu0 %v784
      %794 = vmatpush.msra.mxu0 %v783
      %795 = vmatpush.msra.mxu0 %v782
      %796 = vmatpush.msra.mxu0 %v781
      %797 = vmatpush.msra.mxu0 %v780
      %798 = vmatpush.msra.mxu0 %v779
      %799 = vmatpush.msra.mxu0 %v778
      %800 = vmatpush.msra.mxu0 %v777
      %801 = vmatpush.msra.mxu0 %v776
      %802 = vmatpush.msra.mxu0 %v775
      %803 = vmatpush.msra.mxu0 %v774
      %804 = vmatpush.msra.mxu0 %v773
      %805 = vmatpush.msra.mxu0 %v772
      %806 = vmatpush.msra.mxu0 %v771
      %807 = vmatmul.f32.gmra.mxu0 %v769
      %v808 = vpop.f32.mrf.mxu0
      %v809 = vadd.f32 %v789, %v808
      %810 = vdwg.mxu0
      %v811 = vxor.u32 %v809, 2147483648
      %v812 = vmul.f32 %v811, 1.442695
      %v813 = vpow.pop %v812
      %v814 = vadd.f32 %v813, 1.0
      %v815 = vrcp.pop %v814
      %v816 = vmul.f32 %v814, %v815
      %v817 = vsub.f32 1.0, %v816
      %v818 = vmul.f32 %v815, %v817
      %v819 = vadd.f32 %v815, %v818
      %vm820 = vweird.f32 %v814
      %vm821 = vweird.f32 %v815
      %vm822 = vmor %vm820, %vm821
      %v823 = vsel %vm822, %v815, %v819
      %v824 = vand.u32 2147483647, %v814
      %vm825 = vcmp.eq.f32.partialorder %v824, 8.507059e+37
      %v826 = vand.u32 %v814, 2147483648
      %v827 = vor.u32 1.1754944e-38, %v826
      %v828 = vsel %vm825, %v827, %v823
      %v829 = vmul.f32 1.0, %v828
      %v830 = vld [vmem:[%s8] sm:$0xff]
      %v831 = vld [vmem:[%s8 + $0x8] sm:$0xff]
      %v832 = vld [vmem:[%s8 + $0x10] sm:$0xff]
      %v833 = vld [vmem:[%s8 + $0x18] sm:$0xff]
      %v834 = vld [vmem:[%s8 + $0x20] sm:$0xff]
      %v835 = vld [vmem:[%s8 + $0x28] sm:$0xff]
      %v836 = vld [vmem:[%s8 + $0x30] sm:$0xff]
      %v837 = vld [vmem:[%s8 + $0x38] sm:$0xff]
      %v838 = vld [vmem:[%s8 + $0x40] sm:$0xff]
      %v839 = vld [vmem:[%s8 + $0x48] sm:$0xff]
      %v840 = vld [vmem:[%s8 + $0x50] sm:$0xff]
      %v841 = vld [vmem:[%s8 + $0x58] sm:$0xff]
      %v842 = vld [vmem:[%s8 + $0x60] sm:$0xff]
      %v843 = vld [vmem:[%s8 + $0x68] sm:$0xff]
      %v844 = vld [vmem:[%s8 + $0x70] sm:$0xff]
      %v845 = vld [vmem:[%s8 + $0x78] sm:$0xff]
      %v846 = vld [vmem:[%s9] sm:$0x1]
      %v848 = vperm.slane %v846, 0
      %850 = vmatpush.msra.mxu0 %v845
      %851 = vmatpush.msra.mxu0 %v844
      %852 = vmatpush.msra.mxu0 %v843
      %853 = vmatpush.msra.mxu0 %v842
      %854 = vmatpush.msra.mxu0 %v841
      %855 = vmatpush.msra.mxu0 %v840
      %856 = vmatpush.msra.mxu0 %v839
      %857 = vmatpush.msra.mxu0 %v838
      %858 = vmatpush.msra.mxu0 %v837
      %859 = vmatpush.msra.mxu0 %v836
      %860 = vmatpush.msra.mxu0 %v835
      %861 = vmatpush.msra.mxu0 %v834
      %862 = vmatpush.msra.mxu0 %v833
      %863 = vmatpush.msra.mxu0 %v832
      %864 = vmatpush.msra.mxu0 %v831
      %865 = vmatpush.msra.mxu0 %v830
      %866 = vmatmul.f32.gmra.mxu0 %v769
      %v867 = vpop.f32.mrf.mxu0
      %v868 = vadd.f32 %v848, %v867
      %869 = vdwg.mxu0
      %v870 = vmul.f32 %v829, %v868
      %v871 = vsub.f32 1.0, %v829
      %v872 = vmul.f32 %v871, %v769
      %v873 = vadd.f32 %v870, %v872
      %s874 = scalar_lea.vmem %s6, 128
      %v875 = vld [vmem:[%s874] sm:$0xff]
      %v876 = vld [vmem:[%s874 + $0x8] sm:$0xff]
      %v877 = vld [vmem:[%s874 + $0x10] sm:$0xff]
      %v878 = vld [vmem:[%s874 + $0x18] sm:$0xff]
      %v879 = vld [vmem:[%s874 + $0x20] sm:$0xff]
      %v880 = vld [vmem:[%s874 + $0x28] sm:$0xff]
      %v881 = vld [vmem:[%s874 + $0x30] sm:$0xff]
      %v882 = vld [vmem:[%s874 + $0x38] sm:$0xff]
      %v883 = vld [vmem:[%s874 + $0x40] sm:$0xff]
      %v884 = vld [vmem:[%s874 + $0x48] sm:$0xff]
      %v885 = vld [vmem:[%s874 + $0x50] sm:$0xff]
      %v886 = vld [vmem:[%s874 + $0x58] sm:$0xff]
      %v887 = vld [vmem:[%s874 + $0x60] sm:$0xff]
      %v888 = vld [vmem:[%s874 + $0x68] sm:$0xff]
      %v889 = vld [vmem:[%s874 + $0x70] sm:$0xff]
      %v890 = vld [vmem:[%s874 + $0x78] sm:$0xff]
      %s891 = scalar_lea.vmem %s7, 1
      %v892 = vld [vmem:[%s891] sm:$0x1]
      %v894 = vperm.slane %v892, 0
      %896 = vmatpush.msra.mxu0 %v890
      %897 = vmatpush.msra.mxu0 %v889
      %898 = vmatpush.msra.mxu0 %v888
      %899 = vmatpush.msra.mxu0 %v887
      %900 = vmatpush.msra.mxu0 %v886
      %901 = vmatpush.msra.mxu0 %v885
      %902 = vmatpush.msra.mxu0 %v884
      %903 = vmatpush.msra.mxu0 %v883
      %904 = vmatpush.msra.mxu0 %v882
      %905 = vmatpush.msra.mxu0 %v881
      %906 = vmatpush.msra.mxu0 %v880
      %907 = vmatpush.msra.mxu0 %v879
      %908 = vmatpush.msra.mxu0 %v878
      %909 = vmatpush.msra.mxu0 %v877
      %910 = vmatpush.msra.mxu0 %v876
      %911 = vmatpush.msra.mxu0 %v875
      %912 = vmatmul.f32.gmra.mxu0 %v873
      %v913 = vpop.f32.mrf.mxu0
      %v914 = vadd.f32 %v894, %v913
      %915 = vdwg.mxu0
      %v916 = vxor.u32 %v914, 2147483648
      %v917 = vmul.f32 %v916, 1.442695
      %v918 = vpow.pop %v917
      %v919 = vadd.f32 %v918, 1.0
      %v920 = vrcp.pop %v919
      %v921 = vmul.f32 %v919, %v920
      %v922 = vsub.f32 1.0, %v921
      %v923 = vmul.f32 %v920, %v922
      %v924 = vadd.f32 %v920, %v923
      %vm925 = vweird.f32 %v919
      %vm926 = vweird.f32 %v920
      %vm927 = vmor %vm925, %vm926
      %v928 = vsel %vm927, %v920, %v924
      %v929 = vand.u32 2147483647, %v919
      %vm930 = vcmp.eq.f32.partialorder %v929, 8.507059e+37
      %v931 = vand.u32 %v919, 2147483648
      %v932 = vor.u32 1.1754944e-38, %v931
      %v933 = vsel %vm930, %v932, %v928
      %v934 = vmul.f32 1.0, %v933
      %s935 = scalar_lea.vmem %s8, 128
      %v936 = vld [vmem:[%s935] sm:$0xff]
      %v937 = vld [vmem:[%s935 + $0x8] sm:$0xff]
      %v938 = vld [vmem:[%s935 + $0x10] sm:$0xff]
      %v939 = vld [vmem:[%s935 + $0x18] sm:$0xff]
      %v940 = vld [vmem:[%s935 + $0x20] sm:$0xff]
      %v941 = vld [vmem:[%s935 + $0x28] sm:$0xff]
      %v942 = vld [vmem:[%s935 + $0x30] sm:$0xff]
      %v943 = vld [vmem:[%s935 + $0x38] sm:$0xff]
      %v944 = vld [vmem:[%s935 + $0x40] sm:$0xff]
      %v945 = vld [vmem:[%s935 + $0x48] sm:$0xff]
      %v946 = vld [vmem:[%s935 + $0x50] sm:$0xff]
      %v947 = vld [vmem:[%s935 + $0x58] sm:$0xff]
      %v948 = vld [vmem:[%s935 + $0x60] sm:$0xff]
      %v949 = vld [vmem:[%s935 + $0x68] sm:$0xff]
      %v950 = vld [vmem:[%s935 + $0x70] sm:$0xff]
      %v951 = vld [vmem:[%s935 + $0x78] sm:$0xff]
      %s952 = scalar_lea.vmem %s9, 1
      %v953 = vld [vmem:[%s952] sm:$0x1]
      %v955 = vperm.slane %v953, 0
      %957 = vmatpush.msra.mxu0 %v951
      %958 = vmatpush.msra.mxu0 %v950
      %959 = vmatpush.msra.mxu0 %v949
      %960 = vmatpush.msra.mxu0 %v948
      %961 = vmatpush.msra.mxu0 %v947
      %962 = vmatpush.msra.mxu0 %v946
      %963 = vmatpush.msra.mxu0 %v945
      %964 = vmatpush.msra.mxu0 %v944
      %965 = vmatpush.msra.mxu0 %v943
      %966 = vmatpush.msra.mxu0 %v942
      %967 = vmatpush.msra.mxu0 %v941
      %968 = vmatpush.msra.mxu0 %v940
      %969 = vmatpush.msra.mxu0 %v939
      %970 = vmatpush.msra.mxu0 %v938
      %971 = vmatpush.msra.mxu0 %v937
      %972 = vmatpush.msra.mxu0 %v936
      %973 = vmatmul.f32.gmra.mxu0 %v873
      %v974 = vpop.f32.mrf.mxu0
      %v975 = vadd.f32 %v955, %v974
      %976 = vdwg.mxu0
      %v977 = vmul.f32 %v934, %v975
      %v978 = vsub.f32 1.0, %v934
      %v979 = vmul.f32 %v978, %v873
      %v980 = vadd.f32 %v977, %v979
      %981 = vst [vmem:[%s374] sm:$0xff] %v980
      %p982 = scmp.lt.s32.totalorder %s21, 1
      %s983 = scalar_select %p982, %s21, 1
      %s984 = smul.addr %s983, 8
      %s985 = scalar_lea.vmem %s10, %s984
      // Predicated region
      $region61: #{embedding_forward.1} parent=59 // pred_check
        %p986 = pneg %p259
      $region62: #{embedding_forward.1} parent=59 // pred_check_branch
        %988 = sbr.rel (%p986) target = $region64
      $region63: #{embedding_forward.1} parent=59 // pred_region
        _
      $region64: #{embedding_forward.1} parent=59 // pred_fallthru
        _
    $region60: #{embedding_forward.1} parent=5 // pred_fallthru
      _
    %p989 = scmp.le.s32.totalorder 2, %s16
    // Predicated region
    $region65: #{embedding_forward.1} parent=5 // pred_check
      %p990 = pneg %p989
    $region66: #{embedding_forward.1} parent=5 // pred_check_branch
      %992 = sbr.rel (%p990) target = $region68
    $region67: #{embedding_forward.1} parent=5 // pred_region
      %s993 = ssub.s32 %s16, 2
      // Predicated region
      $region69: #{embedding_forward.1} parent=67 // pred_check
        %p994 = pneg %p265
      $region70: #{embedding_forward.1} parent=67 // pred_check_branch
        %996 = sbr.rel (%p994) target = $region72
      $region71: #{embedding_forward.1} parent=67 // pred_region
        %p997 = scmp.lt.s32.totalorder %s22, 1
        %s998 = scalar_select %p997, %s22, 1
        %s999 = smul.addr %s998, 8
        %s1000 = scalar_lea.vmem %s10, %s999
      $region72: #{embedding_forward.1} parent=67 // pred_fallthru
        _
    $region68: #{embedding_forward.1} parent=5 // pred_fallthru
      _
  $region6: #{embedding_forward.1} parent=0 // loop_footer
    %s20 = sadd.s32 1, %s16
  $region7: #{embedding_forward.1} parent=0 // loop_footer_branch
    %15 = sbr.rel target = $region3
  $region8: #{embedding_forward.1} parent=0 // loop_exit
    _

</llo_original>
